<compile_context>
chip_gen: v7x
topology: tpu7x:2x2x1
jax: 0.10.0
libtpu: 0.0.40
codegen_flags: <defaults>
</compile_context>

<pallas_src>
import functools

import jax
import jax.numpy as jnp
from jax.experimental import pallas as pl
from jax.experimental.pallas import tpu as pltpu


def _round_up(x, m):
    return ((x + m - 1) // m) * m


def _pick_tile(dim, target, quantum):
    """Largest tile <= target that is a multiple of `quantum` and divides `dim`;
    falls back to the full dim (always legal as a block shape)."""
    if dim <= target:
        return dim
    t = (min(target, dim) // quantum) * quantum
    while t >= quantum:
        if dim % t == 0:
            return t
        t -= quantum
    return dim


def _enblock_kernel(xg_ref, wt_ref, b_ref, t_ref, o_ref, acc_ref, *, activation):
    # xg_ref: (1, tv, S*C_in) bf16  gathered spiral features (V-tile, this batch)
    # wt_ref: (S*C_in, Hp)    bf16  transposed Linear weight, zero-padded to Hp
    # b_ref : (1, Hp)         f32   Linear bias, zero-padded
    # t_ref : (tvo, tv)       bf16  down_transform tile
    # o_ref : (1, tvo, Hp)          pooled output tile (written at last V-tile)
    # acc_ref: (tvo, Hp)      f32   VMEM accumulator across the V (reduction) axis
    k = pl.program_id(2)

    @pl.when(k == 0)
    def _():
        acc_ref[...] = jnp.zeros_like(acc_ref)

    xg = xg_ref[0]                                                  # [tv, S*C_in]
    h = jnp.dot(xg, wt_ref[...], preferred_element_type=jnp.float32)
    h = h + b_ref[...]                                              # [tv, Hp] f32
    if activation == "relu":
        h = jnp.maximum(h, 0.0)
    elif activation == "elu":
        h = jnp.where(h > 0, h, jnp.exp(h) - 1.0)
    # 'identity' -> no-op

    acc_ref[...] += jnp.dot(t_ref[...], h.astype(t_ref.dtype),
                            preferred_element_type=jnp.float32)     # [tvo, Hp]

    @pl.when(k == pl.num_programs(2) - 1)
    def _():
        o_ref[0] = acc_ref[...].astype(o_ref.dtype)


def spiral_enblock(x, indices, weight, bias, down_transform, activation="identity"):
    """x: [B, V, C_in] f32, indices: [V, S] i32, weight: [H, S*C_in],
    bias: [H], down_transform: [V_out, V].  Returns [B, V_out, H]."""
    B, V, C_in = x.shape
    Vi, S = indices.shape
    assert Vi == V
    H, SC = weight.shape
    assert SC == S * C_in
    V_out, Vt = down_transform.shape
    assert Vt == V

    Hp = _round_up(H, 128)           # lane-dense output width

    # --- glue: spiral gather (pure indexing), downcast matmul operands to bf16.
    xg = x[:, indices.reshape(-1), :].reshape(B, V, SC).astype(jnp.bfloat16)
    wt = jnp.zeros((SC, Hp), jnp.bfloat16).at[:, :H].set(
        weight.T.astype(jnp.bfloat16))
    bp = jnp.zeros((1, Hp), jnp.float32).at[0, :H].set(
        bias.astype(jnp.float32))
    tp = down_transform.astype(jnp.bfloat16)

    # Tiles: tv must be a multiple of 128 (it is both a sublane dim of xg and the
    # lane dim of the down_transform tile) or the full V; tvo a multiple of 8 or V_out.
    tv = _pick_tile(V, 512, 128)
    tvo = _pick_tile(V_out, 256, 8)
    grid = (B, V_out // tvo, V // tv)

    kernel = functools.partial(_enblock_kernel, activation=activation)

    out_p = pl.pallas_call(
        kernel,
        out_shape=jax.ShapeDtypeStruct((B, V_out, Hp), x.dtype),
        grid_spec=pltpu.PrefetchScalarGridSpec(
            num_scalar_prefetch=0,
            grid=grid,
            in_specs=[
                pl.BlockSpec((1, tv, SC), lambda b, j, k: (b, k, 0)),
                pl.BlockSpec((SC, Hp), lambda b, j, k: (0, 0)),
                pl.BlockSpec((1, Hp), lambda b, j, k: (0, 0)),
                pl.BlockSpec((tvo, tv), lambda b, j, k: (j, k)),
            ],
            out_specs=pl.BlockSpec((1, tvo, Hp), lambda b, j, k: (b, j, 0)),
            scratch_shapes=[pltpu.VMEM((tvo, Hp), jnp.float32)],
        ),
        compiler_params=pltpu.CompilerParams(
            dimension_semantics=("parallel", "parallel", "arbitrary"),
            vmem_limit_bytes=48 * 1024 * 1024,
        ),
    )(xg, wt, bp, tp)

    return out_p[:, :, :H]


def _xavier_uniform(key, shape):
    fan_out, fan_in = shape
    limit = (6.0 / (fan_in + fan_out)) ** 0.5
    return jax.random.uniform(key, shape, jnp.float32, -limit, limit)


if __name__ == "__main__":
    # Small, module-consistent shapes.
    B, V, C_in = 2, 16, 4        # batch, vertices, in_channels
    S = 8                        # spiral sequence length
    H = 32                       # hidden_channels
    V_out = 8                    # vertices after down_transform

    key = jax.random.PRNGKey(0)
    kx, ki, kw, kt = jax.random.split(key, 4)

    x = jax.random.normal(kx, (B, V, C_in), jnp.float32)
    indices = jax.random.randint(ki, (V, S), 0, V, jnp.int32)

    # Deterministic parameter init (mirrors SpiralConv.reset_parameters:
    # xavier_uniform_ weight, zero bias).
    weight = _xavier_uniform(kw, (H, S * C_in))
    bias = jnp.zeros((H,), jnp.float32)

    # Dense down_transform (the PyTorch version uses a sparse V_out x V matrix;
    # pool_bvc(x, T) == T @ x per batch).
    down_transform = jax.random.uniform(kt, (V_out, V), jnp.float32)
    down_transform = down_transform / jnp.sum(down_transform, axis=1, keepdims=True)

    out = spiral_enblock(x, indices, weight, bias, down_transform,
                         activation="identity")
    out = jax.block_until_ready(out)

    # Reference in plain JAX (f32) for sanity; kernel uses bf16 matmul operands
    # with f32 accumulation, hence the looser tolerance.
    xg_ref = x[:, indices.reshape(-1), :].reshape(B, V, S * C_in)
    h_ref = jnp.einsum("bvk,hk->bvh", xg_ref, weight) + bias
    ref = jnp.einsum("ov,bvh->boh", down_transform, h_ref)
    assert out.shape == (B, V_out, H)
    assert jnp.allclose(out, ref, atol=5e-2, rtol=5e-2), (
        float(jnp.max(jnp.abs(out - ref))))

    print("KERNEL_OK")
</pallas_src>

<mosaic_0001>
module attributes {stable_mosaic.version = 11 : i64} {
  func.func @_enblock_kernel(%arg0: i32, %arg1: i32, %arg2: i32, %arg3: memref<1x16x32xbf16, #tpu.memory_space<vmem>>, %arg4: memref<32x128xbf16, #tpu.memory_space<vmem>>, %arg5: memref<1x128xf32, #tpu.memory_space<vmem>>, %arg6: memref<8x16xbf16, #tpu.memory_space<vmem>>, %arg7: memref<1x8x128xf32, #tpu.memory_space<vmem>>, %arg8: memref<8x128xf32, #tpu.memory_space<vmem>>) attributes {dimension_semantics = [#tpu.dimension_semantics<parallel>, #tpu.dimension_semantics<parallel>, #tpu.dimension_semantics<arbitrary>], iteration_bounds = array<i64: 2, 1, 1>, scalar_prefetch = 0 : i64, scratch_operands = 1 : i64, tpu.core_type = #tpu.core_type<tc>, window_params = [{transform_indices = @transform_0, window_bounds = array<i64: 1, 16, 32>}, {pipeline_mode = #tpu.pipeline_mode<synchronous>, transform_indices = @transform_1, window_bounds = array<i64: 32, 128>}, {pipeline_mode = #tpu.pipeline_mode<synchronous>, transform_indices = @transform_2, window_bounds = array<i64: 1, 128>}, {transform_indices = @transform_3, window_bounds = array<i64: 8, 16>}, {transform_indices = @transform_4, window_bounds = array<i64: 1, 8, 128>}]} {
    %c0_i32 = arith.constant 0 : i32
    %0 = arith.cmpi eq, %arg2, %c0_i32 : i32
    %1 = arith.extui %0 : i1 to i32
    %c0_i32_0 = arith.constant 0 : i32
    %2 = arith.cmpi ne, %1, %c0_i32_0 : i32
    scf.if %2 {
      %cst_16 = arith.constant 0.000000e+00 : f32
      %19 = vector.broadcast %cst_16 : f32 to vector<8x128xf32>
      %c0_17 = arith.constant 0 : index
      %c0_18 = arith.constant 0 : index
      %20 = vector.load %arg8[%c0_17, %c0_18] : memref<8x128xf32, #tpu.memory_space<vmem>>, vector<8x128xf32>
      tpu.vector_store %arg8[%c0_17, %c0_18], %19 {strides = array<i32>} : memref<8x128xf32, #tpu.memory_space<vmem>>, vector<8x128xf32>,
    } else {
    }
    %c0 = arith.constant 0 : index
    %c0_1 = arith.constant 0 : index
    %c0_2 = arith.constant 0 : index
    %3 = vector.load %arg3[%c0, %c0_1, %c0_2] : memref<1x16x32xbf16, #tpu.memory_space<vmem>>, vector<1x16x32xbf16>
    %4 = vector.shape_cast %3 : vector<1x16x32xbf16> to vector<16x32xbf16>
    %c0_3 = arith.constant 0 : index
    %c0_4 = arith.constant 0 : index
    %5 = vector.load %arg4[%c0_3, %c0_4] : memref<32x128xbf16, #tpu.memory_space<vmem>>, vector<32x128xbf16>
    %cst = arith.constant dense<0.000000e+00> : vector<16x128xf32>
    %6 = tpu.matmul %4, %5, %cst {dimension_numbers = #tpu.dot_dimension_numbers<[1], [0], [0], [1], [0, 0, 1, 1], [], []>} : vector<16x32xbf16>, vector<32x128xbf16>, vector<16x128xf32> -> vector<16x128xf32>
    %c0_5 = arith.constant 0 : index
    %c0_6 = arith.constant 0 : index
    %7 = vector.load %arg5[%c0_5, %c0_6] : memref<1x128xf32, #tpu.memory_space<vmem>>, vector<1x128xf32>
    %8 = vector.broadcast %7 : vector<1x128xf32> to vector<16x128xf32>
    %9 = arith.addf %6, %8 : vector<16x128xf32>
    %c0_7 = arith.constant 0 : index
    %c0_8 = arith.constant 0 : index
    %10 = vector.load %arg8[%c0_7, %c0_8] : memref<8x128xf32, #tpu.memory_space<vmem>>, vector<8x128xf32>
    %c0_9 = arith.constant 0 : index
    %c0_10 = arith.constant 0 : index
    %11 = vector.load %arg6[%c0_9, %c0_10] : memref<8x16xbf16, #tpu.memory_space<vmem>>, vector<8x16xbf16>
    %12 = arith.truncf %9 : vector<16x128xf32> to vector<16x128xbf16>
    %cst_11 = arith.constant dense<0.000000e+00> : vector<8x128xf32>
    %13 = tpu.matmul %11, %12, %cst_11 {dimension_numbers = #tpu.dot_dimension_numbers<[1], [0], [0], [1], [0, 0, 1, 1], [], []>} : vector<8x16xbf16>, vector<16x128xbf16>, vector<8x128xf32> -> vector<8x128xf32>
    %14 = arith.addf %10, %13 : vector<8x128xf32>
    %c0_12 = arith.constant 0 : index
    %c0_13 = arith.constant 0 : index
    %15 = vector.load %arg8[%c0_12, %c0_13] : memref<8x128xf32, #tpu.memory_space<vmem>>, vector<8x128xf32>
    tpu.vector_store %arg8[%c0_12, %c0_13], %14 {strides = array<i32>} : memref<8x128xf32, #tpu.memory_space<vmem>>, vector<8x128xf32>,
    %c0_i32_14 = arith.constant 0 : i32
    %16 = arith.cmpi eq, %arg2, %c0_i32_14 : i32
    %17 = arith.extui %16 : i1 to i32
    %c0_i32_15 = arith.constant 0 : i32
    %18 = arith.cmpi ne, %17, %c0_i32_15 : i32
    scf.if %18 {
      %c0_16 = arith.constant 0 : index
      %c0_17 = arith.constant 0 : index
      %19 = vector.load %arg8[%c0_16, %c0_17] : memref<8x128xf32, #tpu.memory_space<vmem>>, vector<8x128xf32>
      %c0_18 = arith.constant 0 : index
      %c0_19 = arith.constant 0 : index
      %c0_20 = arith.constant 0 : index
      %20 = vector.load %arg7[%c0_18, %c0_19, %c0_20] : memref<1x8x128xf32, #tpu.memory_space<vmem>>, vector<1x8x128xf32>
      %21 = vector.shape_cast %20 : vector<1x8x128xf32> to vector<8x128xf32>
      %22 = vector.shape_cast %19 : vector<8x128xf32> to vector<1x8x128xf32>
      tpu.vector_store %arg7[%c0_18, %c0_19, %c0_20], %22 {strides = array<i32>} : memref<1x8x128xf32, #tpu.memory_space<vmem>>, vector<1x8x128xf32>,
    } else {
    }
    return
  }
  func.func @transform_0(%arg0: i32, %arg1: i32, %arg2: i32) -> (i32, i32, i32) {
    %c0_i32 = arith.constant 0 : i32
    %c0_i32_0 = arith.constant 0 : i32
    return %arg0, %arg2, %c0_i32 : i32, i32, i32
  }
  func.func @transform_1(%arg0: i32, %arg1: i32, %arg2: i32) -> (i32, i32) {
    %c0_i32 = arith.constant 0 : i32
    %c0_i32_0 = arith.constant 0 : i32
    %c0_i32_1 = arith.constant 0 : i32
    return %c0_i32, %c0_i32_0 : i32, i32
  }
  func.func @transform_2(%arg0: i32, %arg1: i32, %arg2: i32) -> (i32, i32) {
    %c0_i32 = arith.constant 0 : i32
    %c0_i32_0 = arith.constant 0 : i32
    %c0_i32_1 = arith.constant 0 : i32
    return %c0_i32, %c0_i32_0 : i32, i32
  }
  func.func @transform_3(%arg0: i32, %arg1: i32, %arg2: i32) -> (i32, i32) {
    %c0_i32 = arith.constant 0 : i32
    return %arg1, %arg2 : i32, i32
  }
  func.func @transform_4(%arg0: i32, %arg1: i32, %arg2: i32) -> (i32, i32, i32) {
    %c0_i32 = arith.constant 0 : i32
    %c0_i32_0 = arith.constant 0 : i32
    return %arg0, %arg1, %c0_i32 : i32, i32, i32
  }
}

</mosaic_0001>

<llo_original>
// kernel: tpu_custom_call.1
$region0: #{tpu_custom_call.1}
  #allocation0 [shape = 'u32[]', space=smem, size = 0x4, offset = 0x4, fixed_abs, tag = 'smem constant byte address 0x4 - core index']
  #allocation1 [shape = 'u32[144,128]{1,0:T(1,128)}', space=vmem, size = 0x12000, scoped, tag = 'internal scratch']
  #allocation2 [shape = 'f32[8,128]{1,0:T(8,128)}', space=vmem, size = 0x1000, scoped, tag = 'scratch operand']
  %s0 = inlined_call_operand.hbm [shape: bf16[2,16,32], index: 0, kind: input, shape index: {}]
  %s1 = inlined_call_operand.hbm [shape: bf16[32,128], index: 1, kind: input, shape index: {}]
  %s2 = inlined_call_operand.vmem [shape: f32[1,128], index: 2, kind: input, shape index: {}]
  %s3 = inlined_call_operand.vmem [shape: bf16[8,16], index: 3, kind: input, shape index: {}]
  %s4 = inlined_call_operand.hbm [shape: f32[2,8,128], index: 4, kind: output, shape index: {}]
  %s5 = sld [smem:[#allocation0]]
  $region65: #{tpu_custom_call.1} parent=0
    _
  %s7 = ssub.s32 1, %s5
  %s8 = scalar_select 0, %s7, %s5
  $region1: #{tpu_custom_call.1} parent=0
    #allocation3 [shape = 'u8[8192]{0}', space=vmem, size = 0x2000, scoped, tag = 'input window, operand 0']
    #allocation4 [shape = 's32[2]{0}', space=sflag, size = 0x8, scoped, tag = 'scoped memory for tpu_custom_call.1']
    #allocation5 [shape = 's32[2]{0}', space=sflag, size = 0x8, scoped, tag = 'scoped memory for tpu_custom_call.1']
    #allocation6 [shape = 'u8[8192]{0}', space=vmem, size = 0x2000, scoped, tag = 'input window, operand 1, single buffered']
    #allocation7 [shape = 's32[1]{0}', space=sflag, size = 0x4, scoped, tag = 'scoped memory for tpu_custom_call.1']
    #allocation8 [shape = 'u8[8192]{0}', space=vmem, size = 0x2000, scoped, tag = 'output window, operand 0']
    %9 = vsyncpa [#allocation4], 0
    %s10 = scalar_lea.sflag [#allocation4], 1
    %11 = vsyncpa %s10, 0
    %12 = vsyncpa [#allocation7], 0
    %13 = vsyncpa [#allocation5], 0
    %s14 = scalar_lea.sflag [#allocation5], 1
    %15 = vsyncpa %s14, 0
    loop: start=0, step=1, limit=4
    $region2: #{tpu_custom_call.1} parent=1 // loop_pre_header
      _
    $region3: #{tpu_custom_call.1} parent=1 // loop_header
      %s17 = sphi 0, %s21
      %p18 = scmp.ge.s32.totalorder %s17, 4
      %s24 = sphi 0, %s43
      %s25 = sphi 0, %s39
      %s26 = sphi 0, %s35
      %s27 = sphi 0, %s24
      %s28 = sphi 0, %s25
      %s29 = sphi 0, %s26
      %s30 = sphi 0, %s27
      %s31 = sphi 0, %s28
      %s32 = sphi 0, %s29
      %s48 = sphi 0, %s50
      %s51 = sphi 0, %s48
      %s52 = sphi 0, %s51
      %s68 = sphi 0, %s52
      %s72 = sphi 0, %s72
      %s74 = sphi 0, %s72
      %s75 = sphi 0, %s74
      %s89 = sphi 0, %s75
      %s93 = sphi 0, %s93
      %s95 = sphi 0, %s93
      %s96 = sphi 0, %s95
      %s110 = sphi 0, %s96
      %s118 = sphi 0, %s120
      %s121 = sphi 0, %s118
      %s122 = sphi 0, %s121
      %s138 = sphi 0, %s122
      %s146 = sphi 0, %s148
      %s149 = sphi 0, %s146
      %s150 = sphi 0, %s149
      %s166 = sphi 0, %s150
    $region4: #{tpu_custom_call.1} parent=1 // loop_header_branch
      %20 = sbr.rel (%p18) target = $region8
    $region5: #{tpu_custom_call.1} parent=1 // loop_body
      %s22 = ssub.s32 %s17, 1
      %s23 = ssub.s32 %s17, 2
      %s33 = sadd.s32 1, %s26
      %p34 = scmp.ge.s32.totalorder %s33, 1
      %s35 = scalar_select %p34, 0, %s33
      %s36 = sadd.s32 1, %s25
      %s37 = scalar_select %p34, %s36, %s25
      %p38 = scmp.ge.s32.totalorder %s37, 1
      %s39 = scalar_select %p38, 0, %s37
      %s40 = sadd.s32 1, %s24
      %s41 = scalar_select %p38, %s40, %s24
      %p42 = scmp.ge.s32.totalorder %s41, 2
      %s43 = scalar_select %p42, 0, %s41
      %s44 = ssub.s32 %s24, %s43
      %s45 = ssub.s32 %s26, %s35
      %s46 = sor.u32 %s44, %s45
      %p47 = scmp.eq.s32.totalorder %s46, 0
      %s49 = sadd.s32 %s48, 1
      %s50 = scalar_select %p47, %s48, %s49
      %p53 = pneg %p47
      %p54 = scmp.eq.s32.totalorder %s17, 1
      %p55 = por %p53, %p54
      %p56 = scmp.ne.s32.totalorder %s48, %s51
      %p57 = scmp.eq.s32.totalorder %s17, 0
      %p58 = por %p56, %p57
      %p59 = scmp.ne.s32.totalorder %s48, %s51
      %p60 = scmp.eq.s32.totalorder %s22, 1
      %p61 = por %p59, %p60
      %p62 = scmp.ne.s32.totalorder %s51, %s52
      %p63 = scmp.eq.s32.totalorder %s22, 0
      %p64 = por %p62, %p63
      %p65 = scmp.ne.s32.totalorder %s51, %s52
      %p66 = scmp.eq.s32.totalorder %s23, 1
      %p67 = por %p65, %p66
      %p69 = scmp.ne.s32.totalorder %s52, %s68
      %p70 = scmp.eq.s32.totalorder %s23, 0
      %p71 = por %p69, %p70
      %s73 = sadd.s32 %s72, 1
      %p76 = scmp.eq.s32.totalorder %s17, 1
      %p77 = scmp.ne.s32.totalorder %s72, %s74
      %p78 = scmp.eq.s32.totalorder %s17, 0
      %p79 = por %p77, %p78
      %p80 = scmp.ne.s32.totalorder %s72, %s74
      %p81 = scmp.eq.s32.totalorder %s22, 1
      %p82 = por %p80, %p81
      %p83 = scmp.ne.s32.totalorder %s74, %s75
      %p84 = scmp.eq.s32.totalorder %s22, 0
      %p85 = por %p83, %p84
      %p86 = scmp.ne.s32.totalorder %s74, %s75
      %p87 = scmp.eq.s32.totalorder %s23, 1
      %p88 = por %p86, %p87
      %p90 = scmp.ne.s32.totalorder %s75, %s89
      %p91 = scmp.eq.s32.totalorder %s23, 0
      %p92 = por %p90, %p91
      %s94 = sadd.s32 %s93, 1
      %p97 = scmp.eq.s32.totalorder %s17, 1
      %p98 = scmp.ne.s32.totalorder %s93, %s95
      %p99 = scmp.eq.s32.totalorder %s17, 0
      %p100 = por %p98, %p99
      %p101 = scmp.ne.s32.totalorder %s93, %s95
      %p102 = scmp.eq.s32.totalorder %s22, 1
      %p103 = por %p101, %p102
      %p104 = scmp.ne.s32.totalorder %s95, %s96
      %p105 = scmp.eq.s32.totalorder %s22, 0
      %p106 = por %p104, %p105
      %p107 = scmp.ne.s32.totalorder %s95, %s96
      %p108 = scmp.eq.s32.totalorder %s23, 1
      %p109 = por %p107, %p108
      %p111 = scmp.ne.s32.totalorder %s96, %s110
      %p112 = scmp.eq.s32.totalorder %s23, 0
      %p113 = por %p111, %p112
      %s114 = ssub.s32 %s25, %s39
      %s115 = ssub.s32 %s26, %s35
      %s116 = sor.u32 %s114, %s115
      %p117 = scmp.eq.s32.totalorder %s116, 0
      %s119 = sadd.s32 %s118, 1
      %s120 = scalar_select %p117, %s118, %s119
      %p123 = pneg %p117
      %p124 = scmp.eq.s32.totalorder %s17, 1
      %p125 = por %p123, %p124
      %p126 = scmp.ne.s32.totalorder %s118, %s121
      %p127 = scmp.eq.s32.totalorder %s17, 0
      %p128 = por %p126, %p127
      %p129 = scmp.ne.s32.totalorder %s118, %s121
      %p130 = scmp.eq.s32.totalorder %s22, 1
      %p131 = por %p129, %p130
      %p132 = scmp.ne.s32.totalorder %s121, %s122
      %p133 = scmp.eq.s32.totalorder %s22, 0
      %p134 = por %p132, %p133
      %p135 = scmp.ne.s32.totalorder %s121, %s122
      %p136 = scmp.eq.s32.totalorder %s23, 1
      %p137 = por %p135, %p136
      %p139 = scmp.ne.s32.totalorder %s122, %s138
      %p140 = scmp.eq.s32.totalorder %s23, 0
      %p141 = por %p139, %p140
      %s142 = ssub.s32 %s24, %s43
      %s143 = ssub.s32 %s25, %s39
      %s144 = sor.u32 %s142, %s143
      %p145 = scmp.eq.s32.totalorder %s144, 0
      %s147 = sadd.s32 %s146, 1
      %s148 = scalar_select %p145, %s146, %s147
      %p151 = pneg %p145
      %p152 = scmp.eq.s32.totalorder %s17, 1
      %p153 = por %p151, %p152
      %p154 = scmp.ne.s32.totalorder %s146, %s149
      %p155 = scmp.eq.s32.totalorder %s17, 0
      %p156 = por %p154, %p155
      %p157 = scmp.ne.s32.totalorder %s146, %s149
      %p158 = scmp.eq.s32.totalorder %s22, 1
      %p159 = por %p157, %p158
      %p160 = scmp.ne.s32.totalorder %s149, %s150
      %p161 = scmp.eq.s32.totalorder %s22, 0
      %p162 = por %p160, %p161
      %p163 = scmp.ne.s32.totalorder %s149, %s150
      %p164 = scmp.eq.s32.totalorder %s23, 1
      %p165 = por %p163, %p164
      %p167 = scmp.ne.s32.totalorder %s150, %s166
      %p168 = scmp.eq.s32.totalorder %s23, 0
      %p169 = por %p167, %p168
      %p170 = scmp.le.s32.totalorder 1, %s17
      %p171 = scmp.lt.s32.totalorder %s17, 3
      %p172 = pnand %p170, %p171
      %p173 = pneg %p172
      // Predicated region
      $region9: #{tpu_custom_call.1} parent=5 // pred_check
        _
      $region10: #{tpu_custom_call.1} parent=5 // pred_check_branch
        %175 = sbr.rel (%p172) target = $region12
      $region11: #{tpu_custom_call.1} parent=5 // pred_region
        %s176 = ssub.s32 %s17, 1
        // Predicated region
        $region13: #{tpu_custom_call.1} parent=11 // pred_check
          %p177 = pneg %p85
        $region14: #{tpu_custom_call.1} parent=11 // pred_check_branch
          %179 = sbr.rel (%p177) target = $region16
        $region15: #{tpu_custom_call.1} parent=11 // pred_region
          %s181 = ssub.s32 256, 256
          %182 = vsyncadd [#allocation7], %s181
          %s183 = sshll.u32 [#allocation6], 4
          %s184 = int_to_ptr.vmem [resolvable:$true] %s183
          %189 = dma.hbm_to_vmem [thread:$0]  %s1, 256, %s184, [#allocation7], 64, 64, 4
        $region16: #{tpu_custom_call.1} parent=11 // pred_fallthru
          _
        // Predicated region
        $region17: #{tpu_custom_call.1} parent=11 // pred_check
          %p190 = pneg %p106
        $region18: #{tpu_custom_call.1} parent=11 // pred_check_branch
          %192 = sbr.rel (%p190) target = $region20
        $region19: #{tpu_custom_call.1} parent=11 // pred_region
          _
        $region20: #{tpu_custom_call.1} parent=11 // pred_fallthru
          _
        // Predicated region
        $region21: #{tpu_custom_call.1} parent=11 // pred_check
          %p193 = pneg %p134
        $region22: #{tpu_custom_call.1} parent=11 // pred_check_branch
          %195 = sbr.rel (%p193) target = $region24
        $region23: #{tpu_custom_call.1} parent=11 // pred_region
          %p196 = scmp.lt.s32.totalorder %s28, 0
          %s197 = scalar_select %p196, %s28, 0
          %p198 = scmp.lt.s32.totalorder %s29, 0
          %s199 = scalar_select %p198, %s29, 0
          %s200 = sadd.s32 %s199, %s197
          %s201 = smul.addr %s200, 4
          %s202 = scalar_lea.vmem %s3, %s201
        $region24: #{tpu_custom_call.1} parent=11 // pred_fallthru
          _
      $region12: #{tpu_custom_call.1} parent=5 // pred_fallthru
        _
      %p203 = scmp.lt.s32.totalorder %s17, 2
      // Predicated region
      $region25: #{tpu_custom_call.1} parent=5 // pred_check
        %p204 = pneg %p203
      $region26: #{tpu_custom_call.1} parent=5 // pred_check_branch
        %206 = sbr.rel (%p204) target = $region28
      $region27: #{tpu_custom_call.1} parent=5 // pred_region
        // Predicated region
        $region29: #{tpu_custom_call.1} parent=27 // pred_check
          %p207 = pneg %p58
        $region30: #{tpu_custom_call.1} parent=27 // pred_check_branch
          %209 = sbr.rel (%p207) target = $region32
        $region31: #{tpu_custom_call.1} parent=27 // pred_region
          %s210 = sand.u32 %s48, 1
          %s211 = scalar_lea.sflag [#allocation4], %s210
          %s212 = sand.u32 %s48, 1
          %s213 = smul.addr %s212, 8
          %s214 = scalar_lea.vmem [#allocation3], %s213
          %s215 = smul.u32 2, %s26
          %s217 = ssub.s32 128, 128
          %218 = vsyncadd %s211, %s217
          %s219 = smul.addr %s24, 2
          %s220 = sadd.s32 %s215, %s219
          %s221 = smul.addr %s220, 64
          %s222 = scalar_lea.hbm %s0, %s221
          %s223 = sshll.u32 %s214, 4
          %s224 = int_to_ptr.vmem [resolvable:$true] %s223
          %229 = dma.hbm_to_vmem [thread:$0]  %s222, 128, %s224, %s211, 64, 64, 4
        $region32: #{tpu_custom_call.1} parent=27 // pred_fallthru
          _
      $region28: #{tpu_custom_call.1} parent=5 // pred_fallthru
        _
      %p230 = scmp.le.s32.totalorder 1, %s17
      %p231 = scmp.lt.s32.totalorder %s17, 3
      %p232 = pnand %p230, %p231
      %p233 = pneg %p232
      // Predicated region
      $region33: #{tpu_custom_call.1} parent=5 // pred_check
        _
      $region34: #{tpu_custom_call.1} parent=5 // pred_check_branch
        %235 = sbr.rel (%p232) target = $region36
      $region35: #{tpu_custom_call.1} parent=5 // pred_region
        %s236 = ssub.s32 %s17, 1
        %s237 = sand.u32 %s51, 1
        %s238 = scalar_lea.sflag [#allocation4], %s237
        %s239 = sand.u32 %s51, 1
        %s240 = smul.addr %s239, 8
        %s241 = scalar_lea.vmem [#allocation3], %s240
        // Predicated region
        $region37: #{tpu_custom_call.1} parent=35 // pred_check
          %p242 = pneg %p64
        $region38: #{tpu_custom_call.1} parent=35 // pred_check_branch
          %244 = sbr.rel (%p242) target = $region40
        $region39: #{tpu_custom_call.1} parent=35 // pred_region
          %245 = dma.done %s238, 128
        $region40: #{tpu_custom_call.1} parent=35 // pred_fallthru
          _
        // Predicated region
        $region41: #{tpu_custom_call.1} parent=35 // pred_check
          %p246 = pneg %p85
        $region42: #{tpu_custom_call.1} parent=35 // pred_check_branch
          %248 = sbr.rel (%p246) target = $region44
        $region43: #{tpu_custom_call.1} parent=35 // pred_region
          %249 = dma.done [#allocation7], 256
        $region44: #{tpu_custom_call.1} parent=35 // pred_fallthru
          _
        %s250 = sand.u32 %s51, 1
        %s251 = scalar_lea.sflag [#allocation4], %s250
        %s252 = sand.u32 %s51, 1
        %s253 = smul.addr %s252, 8
        %s254 = scalar_lea.vmem [#allocation3], %s253
        %p255 = pneg %p64
        %p256 = pneg %p61
        %p257 = pneg %p85
        %p258 = pneg %p82
        %p259 = pneg %p106
        %p260 = pneg %p103
        %p261 = scmp.lt.s32.totalorder %s28, 0
        %s262 = scalar_select %p261, %s28, 0
        %p263 = scmp.lt.s32.totalorder %s29, 0
        %s264 = scalar_select %p263, %s29, 0
        %s265 = sadd.s32 %s264, %s262
        %s266 = smul.addr %s265, 4
        %s267 = scalar_lea.vmem %s3, %s266
        %p268 = pneg %p134
        %p269 = pneg %p131
        %p270 = pneg %p162
        %p271 = pneg %p159
        %s272 = sand.u32 %s149, 1
        %s273 = scalar_lea.sflag [#allocation5], %s272
        %s274 = sand.u32 %s149, 1
        %s275 = smul.addr %s274, 8
        %s276 = scalar_lea.vmem [#allocation8], %s275
        %s277 = smul.u32 2, %s29
        %p278 = scmp.lt.s32.totalorder %s28, 0
        %s279 = scalar_select %p278, %s28, 0
        %p280 = scmp.lt.s32.totalorder %s29, 0
        %s281 = scalar_select %p280, %s29, 0
        %s282 = sadd.s32 %s281, %s279
        %s283 = smul.addr %s282, 4
        %s284 = scalar_lea.vmem %s3, %s283
        %p286 = scmp.eq.s32.totalorder %s29, 0
        // Predicated region
        $region45: #{tpu_custom_call.1} parent=35 // pred_check
          %p287 = pneg %p286
        $region46: #{tpu_custom_call.1} parent=35 // pred_check_branch
          %289 = sbr.rel (%p287) target = $region48
        $region47: #{tpu_custom_call.1} parent=35 // pred_region
          %290 = vst [vmem:[#allocation2] sm:$0xff] 0.0
        $region48: #{tpu_custom_call.1} parent=35 // pred_fallthru
          _
        %v291 = vld [vmem:[%s241] sm:$0xf]
        %v292 = vld [vmem:[%s241 + $0x4] sm:$0xf]
        %v293 = vld [vmem:[#allocation6] sm:$0xf]
        %v294 = vld [vmem:[#allocation6 + $0x4] sm:$0xf]
        %v295 = vld [vmem:[#allocation6 + $0x8] sm:$0xf]
        %v296 = vld [vmem:[#allocation6 + $0xc] sm:$0xf]
        %v297 = vld [vmem:[%s2] sm:$0x1]
        %v299 = vlaneseq
        %v300 = vshrl.u32 %v299, 7
        %v301 = vsub.s32 0, %v300
        %v302 = vrot.slane %v297, %v301
        %v306 = vunpack.c.l.b16 %v291
        %v307 = vunpack.c.l.b16 %v292
        %v308 = vpack.c.b16 %v307, %v306
        %v313 = vunpack.c.l.b16 %v293
        %v314 = vunpack.c.l.b16 %v294
        %v315 = vunpack.c.l.b16 %v295
        %v316 = vunpack.c.l.b16 %v296
        %v317 = vpack.c.b16 %v314, %v313
        %v318 = vpack.c.b16 %v316, %v315
        %vm321 = vcmask 261120
        %v323 = vsel %vm321, %v308, 0
        %325 = vmatprep.subr.bf16.mxu0 0
        %326 = vmatpush1.bf16.msra.mxu0 %v317
        %327 = vmatprep.subr.bf16.mxu0 0
        %328 = vmatpush1.bf16.msra.mxu0 %v318
        %329 = vmatprep.subr.bf16.mxu0 0
        %330 = vmatpush1.bf16.msra.mxu0 0
        %331 = vmatprep.subr.bf16.mxu0 0
        %332 = vmatpush1.bf16.msra.mxu0 0
        %333 = vmatprep.subr.bf16.mxu0 0
        %334 = vmatpush1.bf16.msra.mxu0 0
        %335 = vmatprep.subr.bf16.mxu0 0
        %336 = vmatpush1.bf16.msra.mxu0 0
        %337 = vmatprep.subr.bf16.mxu0 0
        %338 = vmatpush1.bf16.msra.mxu0 0
        %339 = vmatprep.subr.bf16.mxu0 0
        %340 = vmatpush1.bf16.msra.mxu0 0
        %341 = vmatprep.subr.bf16.mxu0 0
        %342 = vmatpush1.bf16.msra.mxu0 0
        %343 = vmatprep.subr.bf16.mxu0 0
        %344 = vmatpush1.bf16.msra.mxu0 0
        %345 = vmatprep.subr.bf16.mxu0 0
        %346 = vmatpush1.bf16.msra.mxu0 0
        %347 = vmatprep.subr.bf16.mxu0 0
        %348 = vmatpush1.bf16.msra.mxu0 0
        %349 = vmatprep.subr.bf16.mxu0 0
        %350 = vmatpush1.bf16.msra.mxu0 0
        %351 = vmatprep.subr.bf16.mxu0 0
        %352 = vmatpush1.bf16.msra.mxu0 0
        %353 = vmatprep.subr.bf16.mxu0 0
        %354 = vmatpush1.bf16.msra.mxu0 0
        %355 = vmatprep.subr.bf16.mxu0 0
        %356 = vmatpush1.bf16.msra.mxu0 0
        %357 = vmatprep.mubr.bf16.mxu0 0
        %358 = vmatmul.mubr.bf16.gmra.mrb[0].mxu0 %v323
        %v359 = vpop.f32.mrb[0].mxu0
        %v360 = vadd.f32 %v302, %v359
        %v361 = vpop.f32.mrb[0].mxu0
        %v362 = vpop.f32.mrb[0].mxu0
        %v363 = vadd.f32 %v302, %v362
        %v364 = vpop.f32.mrb[0].mxu0
        %365 = vdwg.mxu0
        %v366 = vld [vmem:[#allocation2] sm:$0xff]
        %v367 = vld [vmem:[%s284] sm:$0xf]
        %v368 = vpack.c.bf16 %v363, %v360
        %vm369 = vcmask 130048
        %v371 = vsel %vm369, %v367, 0
        %373 = vmatprep.subr.bf16.mxu0 0
        %374 = vmatpush1.bf16.msra.mxu0 %v368
        %375 = vmatprep.subr.bf16.mxu0 0
        %376 = vmatpush1.bf16.msra.mxu0 0
        %377 = vmatprep.subr.bf16.mxu0 0
        %378 = vmatpush1.bf16.msra.mxu0 0
        %379 = vmatprep.subr.bf16.mxu0 0
        %380 = vmatpush1.bf16.msra.mxu0 0
        %381 = vmatprep.subr.bf16.mxu0 0
        %382 = vmatpush1.bf16.msra.mxu0 0
        %383 = vmatprep.subr.bf16.mxu0 0
        %384 = vmatpush1.bf16.msra.mxu0 0
        %385 = vmatprep.subr.bf16.mxu0 0
        %386 = vmatpush1.bf16.msra.mxu0 0
        %387 = vmatprep.subr.bf16.mxu0 0
        %388 = vmatpush1.bf16.msra.mxu0 0
        %389 = vmatprep.subr.bf16.mxu0 0
        %390 = vmatpush1.bf16.msra.mxu0 0
        %391 = vmatprep.subr.bf16.mxu0 0
        %392 = vmatpush1.bf16.msra.mxu0 0
        %393 = vmatprep.subr.bf16.mxu0 0
        %394 = vmatpush1.bf16.msra.mxu0 0
        %395 = vmatprep.subr.bf16.mxu0 0
        %396 = vmatpush1.bf16.msra.mxu0 0
        %397 = vmatprep.subr.bf16.mxu0 0
        %398 = vmatpush1.bf16.msra.mxu0 0
        %399 = vmatprep.subr.bf16.mxu0 0
        %400 = vmatpush1.bf16.msra.mxu0 0
        %401 = vmatprep.subr.bf16.mxu0 0
        %402 = vmatpush1.bf16.msra.mxu0 0
        %403 = vmatprep.subr.bf16.mxu0 0
        %404 = vmatpush1.bf16.msra.mxu0 0
        %405 = vmatprep.mubr.bf16.mxu0 0
        %406 = vmatmul.mubr.bf16.gmra.mrb[0].mxu0 %v371
        %v407 = vpop.f32.mrb[0].mxu0
        %v408 = vadd.f32 0.0, %v407
        %v409 = vpop.f32.mrb[0].mxu0
        %v410 = vpop.f32.mrb[0].mxu0
        %v411 = vpop.f32.mrb[0].mxu0
        %412 = vdwg.mxu0
        %v413 = vadd.f32 %v366, %v408
        %414 = vst [vmem:[#allocation2] sm:$0xff] %v413
        // Predicated region
        $region49: #{tpu_custom_call.1} parent=35 // pred_check
          %p415 = pneg %p286
        $region50: #{tpu_custom_call.1} parent=35 // pred_check_branch
          %417 = sbr.rel (%p415) target = $region52
        $region51: #{tpu_custom_call.1} parent=35 // pred_region
          %v418 = vld [vmem:[#allocation2] sm:$0xff]
          %419 = vst [vmem:[%s276] sm:$0xff] %v418
        $region52: #{tpu_custom_call.1} parent=35 // pred_fallthru
          _
        %s420 = sand.u32 %s149, 1
        %s421 = scalar_lea.sflag [#allocation5], %s420
        %s422 = sand.u32 %s149, 1
        %s423 = smul.addr %s422, 8
        %s424 = scalar_lea.vmem [#allocation8], %s423
        // Predicated region
        $region53: #{tpu_custom_call.1} parent=35 // pred_check
          %p425 = pneg %p159
        $region54: #{tpu_custom_call.1} parent=35 // pred_check_branch
          %427 = sbr.rel (%p425) target = $region56
        $region55: #{tpu_custom_call.1} parent=35 // pred_region
          %s429 = ssub.s32 128, 128
          %430 = vsyncadd %s421, %s429
          %s431 = sadd.s32 %s28, %s27
          %s432 = smul.addr %s431, 128
          %s433 = scalar_lea.hbm %s4, %s432
          %s435 = sshll.u32 %s424, 4
          %s436 = int_to_ptr.vmem [resolvable:$true] %s435
          %438 = dma.vmem_to_hbm [thread:$0]  %s436, 128, %s433, %s421
        $region56: #{tpu_custom_call.1} parent=35 // pred_fallthru
          _
      $region36: #{tpu_custom_call.1} parent=5 // pred_fallthru
        _
      %p439 = scmp.le.s32.totalorder 2, %s17
      // Predicated region
      $region57: #{tpu_custom_call.1} parent=5 // pred_check
        %p440 = pneg %p439
      $region58: #{tpu_custom_call.1} parent=5 // pred_check_branch
        %442 = sbr.rel (%p440) target = $region60
      $region59: #{tpu_custom_call.1} parent=5 // pred_region
        %s443 = ssub.s32 %s17, 2
        // Predicated region
        $region61: #{tpu_custom_call.1} parent=59 // pred_check
          %p444 = pneg %p165
        $region62: #{tpu_custom_call.1} parent=59 // pred_check_branch
          %446 = sbr.rel (%p444) target = $region64
        $region63: #{tpu_custom_call.1} parent=59 // pred_region
          %s447 = sand.u32 %s150, 1
          %s448 = scalar_lea.sflag [#allocation5], %s447
          %s449 = sand.u32 %s150, 1
          %s450 = smul.addr %s449, 8
          %s451 = scalar_lea.vmem [#allocation8], %s450
          %452 = dma.done %s448, 128
        $region64: #{tpu_custom_call.1} parent=59 // pred_fallthru
          _
      $region60: #{tpu_custom_call.1} parent=5 // pred_fallthru
        _
    $region6: #{tpu_custom_call.1} parent=1 // loop_footer
      %s21 = sadd.s32 1, %s17
    $region7: #{tpu_custom_call.1} parent=1 // loop_footer_branch
      %16 = sbr.rel target = $region3
    $region8: #{tpu_custom_call.1} parent=1 // loop_exit
      _
    %453 = vsyncpa [#allocation4], 1
    %s454 = scalar_lea.sflag [#allocation4], 1
    %455 = vsyncpa %s454, 1
    %456 = vsyncpa [#allocation7], 1
    %457 = vsyncpa [#allocation5], 1
    %s458 = scalar_lea.sflag [#allocation5], 1
    %459 = vsyncpa %s458, 1

</llo_original>
